<compile_context>
chip_gen: v7x
topology: tpu7x:2x2x1
jax: 0.10.0
libtpu: 0.0.40
codegen_flags: <defaults>
</compile_context>

<pallas_src>
import numpy as np
import jax
import jax.numpy as jnp
from jax.experimental import pallas as pl
from jax.experimental.pallas import tpu as pltpu

_LANES = 128           # vreg lane width; last dim of the lane-dense slab
_MAX_TILE_ROWS = 2048  # 2048*128*4B = 1 MiB/tile -> ~4 MiB VMEM double-buffered in+out


def _copy_kernel(x_ref, o_ref):
    # Identity data path: one lane-dense (tile_rows, 128) tile per grid step.
    o_ref[...] = x_ref[...]


def _sublane_multiple(dtype) -> int:
    # 8 sublanes for 4-byte dtypes, 16 for 2-byte (bf16), 32 for 1-byte (int8/fp8).
    itemsize = jnp.dtype(dtype).itemsize
    return 8 * max(1, 4 // itemsize)


@jax.jit
def _identity_through_pallas(pcd):
    orig_shape = pcd.shape
    total = int(np.prod(orig_shape))
    sub = _sublane_multiple(pcd.dtype)

    # Lane-dense (rows, 128) slab; pad rows only to the sublane multiple (no
    # whole-tile rounding) and let the final grid block be ragged — Pallas
    # masks that one partial block, every other store is a full unmasked vst.
    rows_needed = pl.cdiv(total, _LANES)
    rows = ((rows_needed + sub - 1) // sub) * sub
    tile_rows = min(_MAX_TILE_ROWS, rows)
    grid_steps = pl.cdiv(rows, tile_rows)

    flat = pcd.reshape(-1)
    pad = rows * _LANES - total
    if pad:
        flat = jnp.pad(flat, (0, pad))
    slab = flat.reshape(rows, _LANES)

    out_slab = pl.pallas_call(
        _copy_kernel,
        out_shape=jax.ShapeDtypeStruct((rows, _LANES), slab.dtype),
        grid=(grid_steps,),
        in_specs=[pl.BlockSpec((tile_rows, _LANES), lambda r: (r, 0))],
        out_specs=pl.BlockSpec((tile_rows, _LANES), lambda r: (r, 0)),
        compiler_params=pltpu.CompilerParams(
            dimension_semantics=("parallel",),
            allow_input_fusion=[True],
        ),
    )(slab)

    out_flat = out_slab.reshape(-1)
    if pad:
        out_flat = out_flat[:total]
    return out_flat.reshape(orig_shape)


def forward_raw(pcd, state=None):
    # TODO(synk): reference PointBackbone.forward_raw is abstract (raises
    # NotImplementedError); there is no compute to translate, so only the
    # (identity) data path is implemented.  `state` is accepted for signature
    # parity and ignored, as in the base class.  The strictly-fastest correct
    # implementation is `return pcd`; the jitted Pallas copy is kept as the
    # required kernel data path.
    return _identity_through_pallas(pcd)


def point_backbone_forward(pcd):
    """Mirrors PointBackbone.forward: dict dispatch + key renaming, then forward_raw."""
    if isinstance(pcd, dict):
        pcd = dict(pcd)  # shallow copy, matching `copy(pcd)` in the reference
        if 'pointcloud' in pcd:
            pcd['pcd'] = pcd['pointcloud']
            del pcd['pointcloud']
        assert 'pcd' in pcd
        return forward_raw(**pcd)
    else:
        return forward_raw(pcd)


if __name__ == "__main__":
    key = jax.random.PRNGKey(0)
    k_pcd, k_state = jax.random.split(key)

    B, N, C = 2, 64, 3
    pcd = jax.random.normal(k_pcd, (B, N, C), dtype=jnp.float32)
    state = jax.random.normal(k_state, (B, 8), dtype=jnp.float32)

    # Raw-tensor path.
    out_raw = point_backbone_forward(pcd)
    jax.block_until_ready(out_raw)

    # Dict path with the 'pointcloud' key renaming and an extra 'state' entry.
    out_dict = point_backbone_forward({'pointcloud': pcd, 'state': state})
    jax.block_until_ready(out_dict)

    # The only checkable semantics of the base class: the data path is identity.
    assert out_raw.shape == (B, N, C) and out_raw.dtype == jnp.float32
    assert np.allclose(np.asarray(out_raw), np.asarray(pcd))
    assert np.allclose(np.asarray(out_dict), np.asarray(pcd))

    print("KERNEL_OK")
</pallas_src>

<mosaic_0001>
module attributes {stable_mosaic.version = 11 : i64} {
  func.func @_copy_kernel(%arg0: i32, %arg1: memref<8x128xf32, #tpu.memory_space<vmem>>, %arg2: memref<8x128xf32, #tpu.memory_space<vmem>>) attributes {dimension_semantics = [#tpu.dimension_semantics<parallel>], iteration_bounds = array<i64: 1>, scalar_prefetch = 0 : i64, scratch_operands = 0 : i64, tpu.core_type = #tpu.core_type<tc>, window_params = [{transform_indices = @transform_0, window_bounds = array<i64: 8, 128>}, {transform_indices = @transform_1, window_bounds = array<i64: 8, 128>}]} {
    %c0 = arith.constant 0 : index
    %c0_0 = arith.constant 0 : index
    %0 = vector.load %arg1[%c0, %c0_0] : memref<8x128xf32, #tpu.memory_space<vmem>>, vector<8x128xf32>
    %c0_1 = arith.constant 0 : index
    %c0_2 = arith.constant 0 : index
    %1 = vector.load %arg2[%c0_1, %c0_2] : memref<8x128xf32, #tpu.memory_space<vmem>>, vector<8x128xf32>
    tpu.vector_store %arg2[%c0_1, %c0_2], %0 {strides = array<i32>} : memref<8x128xf32, #tpu.memory_space<vmem>>, vector<8x128xf32>,
    return
  }
  func.func @transform_0(%arg0: i32) -> (i32, i32) {
    %c0_i32 = arith.constant 0 : i32
    %c0_i32_0 = arith.constant 0 : i32
    return %arg0, %c0_i32 : i32, i32
  }
  func.func @transform_1(%arg0: i32) -> (i32, i32) {
    %c0_i32 = arith.constant 0 : i32
    %c0_i32_0 = arith.constant 0 : i32
    return %arg0, %c0_i32 : i32, i32
  }
}

</mosaic_0001>

<llo_original>
// kernel: _identity_through_pallas.2
$region0: #{_identity_through_pallas.2}
  #allocation0 [shape = 'u32[]', space=smem, size = 0x4, offset = 0x4, fixed_abs, tag = 'smem constant byte address 0x4 - core index']
  #allocation1 [shape = 'u32[144,128]{1,0:T(1,128)}', space=vmem, size = 0x12000, scoped, tag = 'internal scratch']
  #allocation2 [shape = 'u32[2048]{0}', space=vmem, size = 0x2000, scoped, tag = 'scoped memory for _identity_through_pallas.2']
  #allocation3 [shape = 'u32[2048]{0}', space=vmem, size = 0x2000, scoped, tag = 'scoped memory for _identity_through_pallas.2']
  #allocation4 [shape = 'u32[2048]{0}', space=vmem, size = 0x2000, scoped, tag = 'scoped memory for _identity_through_pallas.2']
  #allocation5 [shape = 'u32[2048]{0}', space=vmem, size = 0x2000, scoped, tag = 'scoped memory for _identity_through_pallas.2']
  #allocation6 [shape = 'u32[2048]{0}', space=vmem, size = 0x2000, scoped, tag = 'scoped memory for _identity_through_pallas.2']
  %s0 = inlined_call_operand.vmem [shape: f32[384], index: 0, kind: input, shape index: {}]
  %s1 = inlined_call_operand.<no memory space> [shape: f32[], index: 1, kind: input, shape index: {}]
  %s2 = inlined_call_operand.vmem [shape: f32[8,128], index: 2, kind: output, shape index: {}]
  %s3 = sld [smem:[#allocation0]]
  $region14: #{_identity_through_pallas.2} parent=0
    _
  %s5 = ssub.s32 1, %s3
  %s6 = scalar_select 0, %s5, %s3
  %v7 = vstv %s1
  $region1: #{_identity_through_pallas.2} parent=0
    #allocation7 [shape = 'u8[4096]{0}', space=vmem, size = 0x1000, dematerialized = true, scoped, tag = 'FusionAdapter Buffer %fusion.1 = f32[8,128]{1,0:T(8,128)} fusion(%param_0.3, %param_1), kind=kLoop, calls=%fused_computation.1.clone, metadata={op_name="jit(_identity_through_pallas)/reshape" stack_frame_id=11}']
    // Predicated region
    $region2: #{_identity_through_pallas.2} parent=1 // pred_check
      _
    $region3: #{_identity_through_pallas.2} parent=1 // pred_check_branch
      %9 = sbr.rel (0) target = $region5
    $region4: #{_identity_through_pallas.2} parent=1 // pred_region
      _
    $region5: #{_identity_through_pallas.2} parent=1 // pred_fallthru
      _
    %v10 = vld [vmem:[%s0] sm:$0x7]
    %v11 = vlaneseq
    %vm13 = vcmp.lt.s32.totalorder %v11, 384
    %v14 = vsel %vm13, %v10, %v7
    %16 = vst [vmem:[#allocation7] sm:$0xff] %v14
    %v17 = vld [vmem:[#allocation7] sm:$0xff]
    %18 = vst [vmem:[%s2] sm:$0xff] %v17
    // Predicated region
    $region6: #{_identity_through_pallas.2} parent=1 // pred_check
      _
    $region7: #{_identity_through_pallas.2} parent=1 // pred_check_branch
      %20 = sbr.rel (0) target = $region9
    $region8: #{_identity_through_pallas.2} parent=1 // pred_region
      _
    $region9: #{_identity_through_pallas.2} parent=1 // pred_fallthru
      _
    // Predicated region
    $region10: #{_identity_through_pallas.2} parent=1 // pred_check
      _
    $region11: #{_identity_through_pallas.2} parent=1 // pred_check_branch
      %22 = sbr.rel (0) target = $region13
    $region12: #{_identity_through_pallas.2} parent=1 // pred_region
      _
    $region13: #{_identity_through_pallas.2} parent=1 // pred_fallthru
      _

</llo_original>
